<compile_context>
chip_gen: v7x
topology: tpu7x:2x2x1
jax: 0.10.0
libtpu: 0.0.40
codegen_flags: <defaults>
</compile_context>

<pallas_src>
import functools

import jax
import jax.numpy as jnp
from jax.experimental import pallas as pl
from jax.experimental.pallas import tpu as pltpu

_LANES = 128
_SUBLANES = 8
_NEG_PAD = -1e30                      # softmax-neutral masking value
_MAX_BLOCK_ROWS = 2048                # row-tile cap
_VMEM_TILE_BUDGET = 20 * 1024 * 1024  # inputs (x2 buffers) + ~6 f32 temporaries


def _round_up(x: int, m: int) -> int:
    return ((x + m - 1) // m) * m


def _distill_kl_kernel(ys_ref, yt_ref, part_ref, *, inv_t: float, batch: int,
                       n_classes: int, block_rows: int, mask_rows: bool,
                       mask_lanes: bool, use_mxu: bool):
    shape = ys_ref.shape  # (tb, c_pad), static

    ys = ys_ref[...].astype(jnp.float32) * inv_t
    yt = yt_ref[...].astype(jnp.float32) * inv_t

    # In-kernel masking of the out-of-bounds tails of a partial block (replaces
    # the old wrapper-side jnp.pad).  Must happen before any max/exp because
    # the OOB region of a partial block is uninitialized.
    valid = None
    if mask_lanes:
        lane = jax.lax.broadcasted_iota(jnp.int32, shape, 1)
        valid = lane < n_classes
    if mask_rows:
        row = pl.program_id(0) * block_rows + jax.lax.broadcasted_iota(
            jnp.int32, shape, 0)
        row_ok = row < batch
        valid = row_ok if valid is None else jnp.logical_and(valid, row_ok)
    if valid is not None:
        # Same constant in both tensors -> masked rows contribute exactly 0.
        ys = jnp.where(valid, ys, _NEG_PAD)
        yt = jnp.where(valid, yt, _NEG_PAD)

    # Row maxes stay on the XLU; everything else avoids cross-lane work.
    ys_shift = ys - jnp.max(ys, axis=1, keepdims=True)
    yt_shift = yt - jnp.max(yt, axis=1, keepdims=True)
    es = jnp.exp(ys_shift)   # EUP
    et = jnp.exp(yt_shift)   # EUP

    if use_mxu:
        # Offload lane-axis sums to the idle MXU: x @ ones replicates the row
        # sum across 128 lanes; keep lane 0.  fp32 contraction precision keeps
        # full f32 accuracy (the ones operand is exact in bf16).
        ones_c = jnp.ones((shape[1], _LANES), jnp.float32)

        def lane_sum(x):
            r = jnp.dot(x, ones_c, preferred_element_type=jnp.float32,
                        precision=jax.lax.Precision.HIGHEST)
            return r[:, :1]
    else:
        def lane_sum(x):
            return jnp.sum(x, axis=1, keepdims=True)

    ss = lane_sum(es)          # (tb, 1) sum exp(ys_shift)
    st = lane_sum(et)          # (tb, 1) sum exp(yt_shift)

    # Fused log-softmax difference:
    #   log_pt - log_ps = (yt_shift - ys_shift) + (log ss - log st)
    # (no full-tile log_ps / log_pt temporaries).  Where p_t underflows to 0,
    # et == 0 exactly and the finite difference gives 0, matching PyTorch
    # kl_div's zero-target semantics.
    c_row = jnp.log(ss) - jnp.log(st)               # (tb, 1)
    num = et * ((yt_shift - ys_shift) + c_row)      # (tb, c_pad)
    row_kl = lane_sum(num)                          # (tb, 1)

    # sum_r row_kl_r / st_r  (one per-row reciprocal, factored out).
    partial = jnp.sum(row_kl * pl.reciprocal(st, approx=False))

    # Lane-dense per-tile partial-sum slab; wrapper reads element [0, 0].
    part_ref[...] = jnp.full(part_ref.shape, partial, dtype=part_ref.dtype)


def distill_kl(y_s, y_t, T: float, *, block_rows: int | None = None):
    """Pallas implementation of DistillKL(T)(y_s, y_t). Returns a scalar f32."""
    assert y_s.shape == y_t.shape and y_s.ndim == 2
    assert y_s.dtype == y_t.dtype
    assert jnp.issubdtype(y_s.dtype, jnp.floating)
    B, C = y_s.shape
    itemsize = jnp.dtype(y_s.dtype).itemsize

    # Class axis handled as one lane-aligned block; ragged tail masked in-kernel.
    c_pad = max(_LANES, _round_up(C, _LANES))

    # ---- row-tile sizing -------------------------------------------------
    if B <= _SUBLANES:
        # Tiny batch: one full-batch tile (block dim == array dim is always legal).
        tb = B
    else:
        if block_rows is not None:
            assert block_rows > 0 and block_rows % _SUBLANES == 0, (
                "block_rows must be a positive multiple of 8")
            tb = block_rows
        else:
            # 2 inputs x 2 pipeline buffers + ~6 full-tile f32 temporaries.
            per_row = c_pad * (2 * 2 * itemsize + 6 * 4)
            tb = int(_VMEM_TILE_BUDGET // per_row)
            tb = (tb // _SUBLANES) * _SUBLANES
            tb = max(_SUBLANES, min(_MAX_BLOCK_ROWS, tb))
            if tb >= B:
                # Ensure >= 2 grid steps so both v7x TensorCores get work.
                tb = _round_up((B + 1) // 2, _SUBLANES)
        tb = min(tb, _round_up(B, _SUBLANES))

    num_tiles = (B + tb - 1) // tb
    mask_rows = (num_tiles * tb != B)
    mask_lanes = (c_pad != C)
    # MXU lane-sum offload for narrow class counts (keep XLU path for wide C
    # and for the tiny non-8-multiple single-tile case).
    use_mxu = (c_pad <= 512) and (tb % _SUBLANES == 0)

    # VMEM: blocks + temporaries estimate, with margin; >= known-safe 32 MiB.
    est_bytes = tb * c_pad * (2 * 2 * itemsize + 6 * 4)
    vmem_limit = int(min(48 * 1024 * 1024, max(32 * 1024 * 1024, 2 * est_bytes)))

    kernel = functools.partial(
        _distill_kl_kernel,
        inv_t=float(1.0 / T), batch=B, n_classes=C, block_rows=tb,
        mask_rows=mask_rows, mask_lanes=mask_lanes, use_mxu=use_mxu)

    partials = pl.pallas_call(
        kernel,
        out_shape=jax.ShapeDtypeStruct((num_tiles, _SUBLANES, _LANES), jnp.float32),
        grid=(num_tiles,),
        in_specs=[
            pl.BlockSpec((tb, c_pad), lambda i: (i, 0)),
            pl.BlockSpec((tb, c_pad), lambda i: (i, 0)),
        ],
        out_specs=pl.BlockSpec((1, _SUBLANES, _LANES), lambda i: (i, 0, 0)),
        compiler_params=pltpu.CompilerParams(
            dimension_semantics=("parallel",),
            vmem_limit_bytes=vmem_limit,
        ),
    )(y_s, y_t)

    # Tiny final reduction in the wrapper keeps the grid axis megacore-parallel.
    return jnp.sum(partials[:, 0, 0]) * (float(T) * float(T)) / float(B)


def _reference_distill_kl(y_s, y_t, T: float):
    # Pure-JAX reference (f32) for correctness checking.
    y_s = y_s.astype(jnp.float32)
    y_t = y_t.astype(jnp.float32)
    log_ps = jax.nn.log_softmax(y_s / T, axis=1)
    p_t = jax.nn.softmax(y_t / T, axis=1)
    log_pt = jax.nn.log_softmax(y_t / T, axis=1)
    return jnp.sum(p_t * (log_pt - log_ps)) / y_s.shape[0] * (T ** 2)


if __name__ == "__main__":
    T = 4.0
    key = jax.random.PRNGKey(0)

    cases = [
        ((8, 128), jnp.float32),    # aligned, single tile, MXU lane-sums
        ((6, 100), jnp.float32),    # tiny ragged batch/class, in-kernel lane mask
        ((20, 200), jnp.float32),   # 2 tiles, row + lane masks, MXU lane-sums
        ((30, 1000), jnp.float32),  # wide-C (XLU) path, 2 tiles, both masks
        ((16, 128), jnp.bfloat16),  # bf16 inputs stream at native width
    ]
    for (B, C), dt in cases:
        key, k_s, k_t = jax.random.split(key, 3)
        y_s = jax.random.normal(k_s, (B, C), dtype=jnp.float32).astype(dt)
        y_t = jax.random.normal(k_t, (B, C), dtype=jnp.float32).astype(dt)

        loss = jax.block_until_ready(distill_kl(y_s, y_t, T))
        ref = _reference_distill_kl(y_s, y_t, T)
        assert jnp.allclose(loss, ref, rtol=2e-4, atol=2e-5), ((B, C), dt, loss, ref)

    print("KERNEL_OK")
</pallas_src>

<mosaic_0001>
module attributes {stable_mosaic.version = 11 : i64} {
  func.func @_distill_kl_kernel(%arg0: i32, %arg1: memref<8x128xf32, #tpu.memory_space<vmem>>, %arg2: memref<8x128xf32, #tpu.memory_space<vmem>>, %arg3: memref<1x8x128xf32, #tpu.memory_space<vmem>>) attributes {dimension_semantics = [#tpu.dimension_semantics<parallel>], iteration_bounds = array<i64: 1>, scalar_prefetch = 0 : i64, scratch_operands = 0 : i64, tpu.core_type = #tpu.core_type<tc>, window_params = [{transform_indices = @transform_0, window_bounds = array<i64: 8, 128>}, {transform_indices = @transform_1, window_bounds = array<i64: 8, 128>}, {transform_indices = @transform_2, window_bounds = array<i64: 1, 8, 128>}]} {
    %c0 = arith.constant 0 : index
    %c0_0 = arith.constant 0 : index
    %0 = vector.load %arg1[%c0, %c0_0] : memref<8x128xf32, #tpu.memory_space<vmem>>, vector<8x128xf32>
    %cst = arith.constant 2.500000e-01 : f32
    %1 = vector.broadcast %cst : f32 to vector<8x128xf32>
    %2 = arith.mulf %0, %1 : vector<8x128xf32>
    %c0_1 = arith.constant 0 : index
    %c0_2 = arith.constant 0 : index
    %3 = vector.load %arg2[%c0_1, %c0_2] : memref<8x128xf32, #tpu.memory_space<vmem>>, vector<8x128xf32>
    %cst_3 = arith.constant 2.500000e-01 : f32
    %4 = vector.broadcast %cst_3 : f32 to vector<8x128xf32>
    %5 = arith.mulf %3, %4 : vector<8x128xf32>
    %cst_4 = arith.constant dense<0xFF800000> : vector<8xf32>
    %6 = vector.multi_reduction <maximumf>, %2, %cst_4 [1] : vector<8x128xf32> to vector<8xf32>
    %7 = vector.shape_cast %6 : vector<8xf32> to vector<8x1xf32>
    %8 = vector.broadcast %7 : vector<8x1xf32> to vector<8x128xf32>
    %9 = arith.subf %2, %8 : vector<8x128xf32>
    %cst_5 = arith.constant dense<0xFF800000> : vector<8xf32>
    %10 = vector.multi_reduction <maximumf>, %5, %cst_5 [1] : vector<8x128xf32> to vector<8xf32>
    %11 = vector.shape_cast %10 : vector<8xf32> to vector<8x1xf32>
    %12 = vector.broadcast %11 : vector<8x1xf32> to vector<8x128xf32>
    %13 = arith.subf %5, %12 : vector<8x128xf32>
    %14 = math.exp %9 : vector<8x128xf32>
    %15 = math.exp %13 : vector<8x128xf32>
    %cst_6 = arith.constant 1.000000e+00 : f32
    %16 = vector.broadcast %cst_6 : f32 to vector<128x128xf32>
    %cst_7 = arith.constant dense<0.000000e+00> : vector<8x128xf32>
    %17 = tpu.matmul %14, %16, %cst_7 {dimension_numbers = #tpu.dot_dimension_numbers<[1], [0], [0], [1], [0, 0, 1, 1], [], []>, precision = #tpu.contract_precision<fp32>} : vector<8x128xf32>, vector<128x128xf32>, vector<8x128xf32> -> vector<8x128xf32>
    %18 = vector.extract_strided_slice %17 {offsets = [0, 0], sizes = [8, 1], strides = [1, 1]} : vector<8x128xf32> to vector<8x1xf32>
    %cst_8 = arith.constant dense<0.000000e+00> : vector<8x128xf32>
    %19 = tpu.matmul %15, %16, %cst_8 {dimension_numbers = #tpu.dot_dimension_numbers<[1], [0], [0], [1], [0, 0, 1, 1], [], []>, precision = #tpu.contract_precision<fp32>} : vector<8x128xf32>, vector<128x128xf32>, vector<8x128xf32> -> vector<8x128xf32>
    %20 = vector.extract_strided_slice %19 {offsets = [0, 0], sizes = [8, 1], strides = [1, 1]} : vector<8x128xf32> to vector<8x1xf32>
    %21 = math.log %18 : vector<8x1xf32>
    %22 = math.log %20 : vector<8x1xf32>
    %23 = arith.subf %21, %22 : vector<8x1xf32>
    %24 = arith.subf %13, %9 : vector<8x128xf32>
    %25 = vector.broadcast %23 : vector<8x1xf32> to vector<8x128xf32>
    %26 = arith.addf %24, %25 : vector<8x128xf32>
    %27 = arith.mulf %15, %26 : vector<8x128xf32>
    %cst_9 = arith.constant dense<0.000000e+00> : vector<8x128xf32>
    %28 = tpu.matmul %27, %16, %cst_9 {dimension_numbers = #tpu.dot_dimension_numbers<[1], [0], [0], [1], [0, 0, 1, 1], [], []>, precision = #tpu.contract_precision<fp32>} : vector<8x128xf32>, vector<128x128xf32>, vector<8x128xf32> -> vector<8x128xf32>
    %29 = vector.extract_strided_slice %28 {offsets = [0, 0], sizes = [8, 1], strides = [1, 1]} : vector<8x128xf32> to vector<8x1xf32>
    %30 = tpu.reciprocal %20 : vector<8x1xf32> -> vector<8x1xf32>
    %31 = arith.mulf %29, %30 : vector<8x1xf32>
    %32 = vector.shape_cast %31 : vector<8x1xf32> to vector<1x8x1xf32>
    %cst_10 = arith.constant dense<0.000000e+00> : vector<1xf32>
    %33 = vector.multi_reduction <add>, %32, %cst_10 [1, 2] : vector<1x8x1xf32> to vector<1xf32>
    %34 = vector.shape_cast %33 : vector<1xf32> to vector<1x1x1xf32>
    %35 = vector.extract %34[0, 0, 0] : f32 from vector<1x1x1xf32>
    %36 = vector.broadcast %35 : f32 to vector<1x8x128xf32>
    %c0_11 = arith.constant 0 : index
    %c0_12 = arith.constant 0 : index
    %c0_13 = arith.constant 0 : index
    %37 = vector.load %arg3[%c0_11, %c0_12, %c0_13] : memref<1x8x128xf32, #tpu.memory_space<vmem>>, vector<1x8x128xf32>
    tpu.vector_store %arg3[%c0_11, %c0_12, %c0_13], %36 {strides = array<i32>} : memref<1x8x128xf32, #tpu.memory_space<vmem>>, vector<1x8x128xf32>,
    return
  }
  func.func @transform_0(%arg0: i32) -> (i32, i32) {
    %c0_i32 = arith.constant 0 : i32
    %c0_i32_0 = arith.constant 0 : i32
    return %arg0, %c0_i32 : i32, i32
  }
  func.func @transform_1(%arg0: i32) -> (i32, i32) {
    %c0_i32 = arith.constant 0 : i32
    %c0_i32_0 = arith.constant 0 : i32
    return %arg0, %c0_i32 : i32, i32
  }
  func.func @transform_2(%arg0: i32) -> (i32, i32, i32) {
    %c0_i32 = arith.constant 0 : i32
    %c0_i32_0 = arith.constant 0 : i32
    %c0_i32_1 = arith.constant 0 : i32
    return %arg0, %c0_i32, %c0_i32_0 : i32, i32, i32
  }
}

</mosaic_0001>

<llo_original>
// kernel: tpu_custom_call.1
$region0: #{tpu_custom_call.1}
  #allocation0 [shape = 'u32[]', space=smem, size = 0x4, offset = 0x4, fixed_abs, tag = 'smem constant byte address 0x4 - core index']
  #allocation1 [shape = 'u32[144,128]{1,0:T(1,128)}', space=vmem, size = 0x12000, scoped, tag = 'internal scratch']
  %s0 = inlined_call_operand.hbm [shape: f32[8,128], index: 0, kind: input, shape index: {}]
  %s1 = inlined_call_operand.hbm [shape: f32[8,128], index: 1, kind: input, shape index: {}]
  %s2 = inlined_call_operand.hbm [shape: f32[1,8,128], index: 2, kind: output, shape index: {}]
  %s3 = sld [smem:[#allocation0]]
  $region26: #{tpu_custom_call.1} parent=0
    _
  %s5 = ssub.s32 1, %s3
  %s6 = scalar_select 0, %s5, %s3
  $region1: #{tpu_custom_call.1} parent=0
    #allocation2 [shape = 'u8[4096]{0}', space=vmem, size = 0x1000, scoped, tag = 'input window, operand 0, single buffered']
    #allocation3 [shape = 's32[1]{0}', space=sflag, size = 0x4, scoped, tag = 'scoped memory for tpu_custom_call.1']
    #allocation4 [shape = 's32[1]{0}', space=sflag, size = 0x4, scoped, tag = 'scoped memory for tpu_custom_call.1']
    #allocation5 [shape = 'u8[4096]{0}', space=vmem, size = 0x1000, scoped, tag = 'input window, operand 1, single buffered']
    #allocation6 [shape = 's32[1]{0}', space=sflag, size = 0x4, scoped, tag = 'scoped memory for tpu_custom_call.1']
    #allocation7 [shape = 'u8[4096]{0}', space=vmem, size = 0x1000, scoped, tag = 'output window, operand 0, single buffered']
    %7 = vsyncpa [#allocation3], 0
    %8 = vsyncpa [#allocation6], 0
    %9 = vsyncpa [#allocation4], 0
    // Predicated region
    $region2: #{tpu_custom_call.1} parent=1 // pred_check
      _
    $region3: #{tpu_custom_call.1} parent=1 // pred_check_branch
      %11 = sbr.rel (0) target = $region5
    $region4: #{tpu_custom_call.1} parent=1 // pred_region
      %s13 = ssub.s32 128, 128
      %14 = vsyncadd [#allocation3], %s13
      %s16 = sshll.u32 [#allocation2], 4
      %s17 = int_to_ptr.vmem [resolvable:$true] %s16
      %19 = dma.hbm_to_vmem [thread:$0]  %s0, 128, %s17, [#allocation3]
    $region5: #{tpu_custom_call.1} parent=1 // pred_fallthru
      _
    // Predicated region
    $region6: #{tpu_custom_call.1} parent=1 // pred_check
      _
    $region7: #{tpu_custom_call.1} parent=1 // pred_check_branch
      %21 = sbr.rel (0) target = $region9
    $region8: #{tpu_custom_call.1} parent=1 // pred_region
      %s23 = ssub.s32 128, 128
      %24 = vsyncadd [#allocation6], %s23
      %s26 = sshll.u32 [#allocation5], 4
      %s27 = int_to_ptr.vmem [resolvable:$true] %s26
      %29 = dma.hbm_to_vmem [thread:$0]  %s1, 128, %s27, [#allocation6]
    $region9: #{tpu_custom_call.1} parent=1 // pred_fallthru
      _
    // Predicated region
    $region10: #{tpu_custom_call.1} parent=1 // pred_check
      _
    $region11: #{tpu_custom_call.1} parent=1 // pred_check_branch
      %31 = sbr.rel (0) target = $region13
    $region12: #{tpu_custom_call.1} parent=1 // pred_region
      %32 = dma.done [#allocation3], 128
    $region13: #{tpu_custom_call.1} parent=1 // pred_fallthru
      _
    // Predicated region
    $region14: #{tpu_custom_call.1} parent=1 // pred_check
      _
    $region15: #{tpu_custom_call.1} parent=1 // pred_check_branch
      %34 = sbr.rel (0) target = $region17
    $region16: #{tpu_custom_call.1} parent=1 // pred_region
      %35 = dma.done [#allocation6], 128
    $region17: #{tpu_custom_call.1} parent=1 // pred_fallthru
      _
    %v36 = vld [vmem:[#allocation2] sm:$0xff]
    %v37 = vmul.f32 %v36, 0.25
    %v38 = vld [vmem:[#allocation5] sm:$0xff]
    %v39 = vmul.f32 %v38, 0.25
    %40 = vmax.xlane.f32.xlu0 %v37
    %v41 = vpop.xlane.xlu0 %40
    %v42 = vsub.f32 %v37, %v41
    %43 = vmax.xlane.f32.xlu0 %v39
    %v44 = vpop.xlane.xlu0 %43
    %v45 = vsub.f32 %v39, %v44
    %v46 = vmul.f32 %v42, 1.442695
    %v47 = vpow.pop %v46
    %v48 = vmul.f32 %v45, 1.442695
    %v49 = vpow.pop %v48
    %50 = vmatprep.subr.mxu0 0.0
    %51 = vmatpush1.msra.mxu0 1.0
    %52 = vmatprep.subr.mxu0 0.0
    %53 = vmatpush1.msra.mxu0 1.0
    %54 = vmatprep.subr.mxu0 0.0
    %55 = vmatpush1.msra.mxu0 1.0
    %56 = vmatprep.subr.mxu0 0.0
    %57 = vmatpush1.msra.mxu0 1.0
    %58 = vmatprep.subr.mxu0 0.0
    %59 = vmatpush1.msra.mxu0 1.0
    %60 = vmatprep.subr.mxu0 0.0
    %61 = vmatpush1.msra.mxu0 1.0
    %62 = vmatprep.subr.mxu0 0.0
    %63 = vmatpush1.msra.mxu0 1.0
    %64 = vmatprep.subr.mxu0 0.0
    %65 = vmatpush1.msra.mxu0 1.0
    %66 = vmatprep.subr.mxu0 0.0
    %67 = vmatpush1.msra.mxu0 1.0
    %68 = vmatprep.subr.mxu0 0.0
    %69 = vmatpush1.msra.mxu0 1.0
    %70 = vmatprep.subr.mxu0 0.0
    %71 = vmatpush1.msra.mxu0 1.0
    %72 = vmatprep.subr.mxu0 0.0
    %73 = vmatpush1.msra.mxu0 1.0
    %74 = vmatprep.subr.mxu0 0.0
    %75 = vmatpush1.msra.mxu0 1.0
    %76 = vmatprep.subr.mxu0 0.0
    %77 = vmatpush1.msra.mxu0 1.0
    %78 = vmatprep.subr.mxu0 0.0
    %79 = vmatpush1.msra.mxu0 1.0
    %80 = vmatprep.subr.mxu0 0.0
    %81 = vmatpush1.msra.mxu0 1.0
    %82 = vmatprep.subr.mxu0 0.0
    %83 = vmatpush1.msra.mxu0 0.0
    %84 = vmatprep.subr.mxu0 0.0
    %85 = vmatpush1.msra.mxu0 0.0
    %86 = vmatprep.subr.mxu0 0.0
    %87 = vmatpush1.msra.mxu0 0.0
    %88 = vmatprep.subr.mxu0 0.0
    %89 = vmatpush1.msra.mxu0 0.0
    %90 = vmatprep.subr.mxu0 0.0
    %91 = vmatpush1.msra.mxu0 0.0
    %92 = vmatprep.subr.mxu0 0.0
    %93 = vmatpush1.msra.mxu0 0.0
    %94 = vmatprep.subr.mxu0 0.0
    %95 = vmatpush1.msra.mxu0 0.0
    %96 = vmatprep.subr.mxu0 0.0
    %97 = vmatpush1.msra.mxu0 0.0
    %98 = vmatprep.subr.mxu0 0.0
    %99 = vmatpush1.msra.mxu0 0.0
    %100 = vmatprep.subr.mxu0 0.0
    %101 = vmatpush1.msra.mxu0 0.0
    %102 = vmatprep.subr.mxu0 0.0
    %103 = vmatpush1.msra.mxu0 0.0
    %104 = vmatprep.subr.mxu0 0.0
    %105 = vmatpush1.msra.mxu0 0.0
    %106 = vmatprep.subr.mxu0 0.0
    %107 = vmatpush1.msra.mxu0 0.0
    %108 = vmatprep.subr.mxu0 0.0
    %109 = vmatpush1.msra.mxu0 0.0
    %110 = vmatprep.subr.mxu0 0.0
    %111 = vmatpush1.msra.mxu0 0.0
    %112 = vmatprep.subr.mxu0 0.0
    %113 = vmatpush1.msra.mxu0 0.0
    %114 = vmatprep.mubr.f32.mxu0 0.0
    %v115 = vand.u32 %v47, 4294901760
    %v116 = vsub.f32 %v47, %v115
    %v117 = vand.u32 %v116, 4294901760
    %v118 = vsub.f32 %v116, %v117
    %v119 = vand.u32 %v118, 4294901760
    %120 = vmatmul.mubr.f32.gmra.mrb[0].mxu0 %v119
    %v121 = vpop.f32.mrb[0].mxu0
    %v122 = vadd.f32 0.0, %v121
    %v123 = vpop.f32.mrb[0].mxu0
    %124 = vdwg.mxu0
    %125 = vmatprep.subr.mxu0 0.0
    %126 = vmatpush1.msra.mxu0 0.0
    %127 = vmatprep.subr.mxu0 0.0
    %128 = vmatpush1.msra.mxu0 0.0
    %129 = vmatprep.subr.mxu0 0.0
    %130 = vmatpush1.msra.mxu0 0.0
    %131 = vmatprep.subr.mxu0 0.0
    %132 = vmatpush1.msra.mxu0 0.0
    %133 = vmatprep.subr.mxu0 0.0
    %134 = vmatpush1.msra.mxu0 0.0
    %135 = vmatprep.subr.mxu0 0.0
    %136 = vmatpush1.msra.mxu0 0.0
    %137 = vmatprep.subr.mxu0 0.0
    %138 = vmatpush1.msra.mxu0 0.0
    %139 = vmatprep.subr.mxu0 0.0
    %140 = vmatpush1.msra.mxu0 0.0
    %141 = vmatprep.subr.mxu0 0.0
    %142 = vmatpush1.msra.mxu0 0.0
    %143 = vmatprep.subr.mxu0 0.0
    %144 = vmatpush1.msra.mxu0 0.0
    %145 = vmatprep.subr.mxu0 0.0
    %146 = vmatpush1.msra.mxu0 0.0
    %147 = vmatprep.subr.mxu0 0.0
    %148 = vmatpush1.msra.mxu0 0.0
    %149 = vmatprep.subr.mxu0 0.0
    %150 = vmatpush1.msra.mxu0 0.0
    %151 = vmatprep.subr.mxu0 0.0
    %152 = vmatpush1.msra.mxu0 0.0
    %153 = vmatprep.subr.mxu0 0.0
    %154 = vmatpush1.msra.mxu0 0.0
    %155 = vmatprep.subr.mxu0 0.0
    %156 = vmatpush1.msra.mxu0 0.0
    %157 = vmatprep.subr.mxu0 0.0
    %158 = vmatpush1.msra.mxu0 0.0
    %159 = vmatprep.subr.mxu0 0.0
    %160 = vmatpush1.msra.mxu0 0.0
    %161 = vmatprep.subr.mxu0 0.0
    %162 = vmatpush1.msra.mxu0 0.0
    %163 = vmatprep.subr.mxu0 0.0
    %164 = vmatpush1.msra.mxu0 0.0
    %165 = vmatprep.subr.mxu0 0.0
    %166 = vmatpush1.msra.mxu0 0.0
    %167 = vmatprep.subr.mxu0 0.0
    %168 = vmatpush1.msra.mxu0 0.0
    %169 = vmatprep.subr.mxu0 0.0
    %170 = vmatpush1.msra.mxu0 0.0
    %171 = vmatprep.subr.mxu0 0.0
    %172 = vmatpush1.msra.mxu0 0.0
    %173 = vmatprep.subr.mxu0 0.0
    %174 = vmatpush1.msra.mxu0 0.0
    %175 = vmatprep.subr.mxu0 0.0
    %176 = vmatpush1.msra.mxu0 0.0
    %177 = vmatprep.subr.mxu0 0.0
    %178 = vmatpush1.msra.mxu0 0.0
    %179 = vmatprep.subr.mxu0 0.0
    %180 = vmatpush1.msra.mxu0 0.0
    %181 = vmatprep.subr.mxu0 0.0
    %182 = vmatpush1.msra.mxu0 0.0
    %183 = vmatprep.subr.mxu0 0.0
    %184 = vmatpush1.msra.mxu0 0.0
    %185 = vmatprep.subr.mxu0 0.0
    %186 = vmatpush1.msra.mxu0 0.0
    %187 = vmatprep.subr.mxu0 0.0
    %188 = vmatpush1.msra.mxu0 0.0
    %189 = vmatprep.mubr.f32.mxu0 0.0
    %v190 = vand.u32 %v47, 4294901760
    %191 = vmatmul.mubr.f32.gmra.mrb[0].mxu0 %v190
    %v192 = vpop.f32.mrb[0].mxu0
    %v193 = vadd.f32 %v122, %v192
    %v194 = vpop.f32.mrb[0].mxu0
    %195 = vdwg.mxu0
    %196 = vmatprep.subr.mxu0 0.0
    %197 = vmatpush1.msra.mxu0 0.0
    %198 = vmatprep.subr.mxu0 0.0
    %199 = vmatpush1.msra.mxu0 0.0
    %200 = vmatprep.subr.mxu0 0.0
    %201 = vmatpush1.msra.mxu0 0.0
    %202 = vmatprep.subr.mxu0 0.0
    %203 = vmatpush1.msra.mxu0 0.0
    %204 = vmatprep.subr.mxu0 0.0
    %205 = vmatpush1.msra.mxu0 0.0
    %206 = vmatprep.subr.mxu0 0.0
    %207 = vmatpush1.msra.mxu0 0.0
    %208 = vmatprep.subr.mxu0 0.0
    %209 = vmatpush1.msra.mxu0 0.0
    %210 = vmatprep.subr.mxu0 0.0
    %211 = vmatpush1.msra.mxu0 0.0
    %212 = vmatprep.subr.mxu0 0.0
    %213 = vmatpush1.msra.mxu0 0.0
    %214 = vmatprep.subr.mxu0 0.0
    %215 = vmatpush1.msra.mxu0 0.0
    %216 = vmatprep.subr.mxu0 0.0
    %217 = vmatpush1.msra.mxu0 0.0
    %218 = vmatprep.subr.mxu0 0.0
    %219 = vmatpush1.msra.mxu0 0.0
    %220 = vmatprep.subr.mxu0 0.0
    %221 = vmatpush1.msra.mxu0 0.0
    %222 = vmatprep.subr.mxu0 0.0
    %223 = vmatpush1.msra.mxu0 0.0
    %224 = vmatprep.subr.mxu0 0.0
    %225 = vmatpush1.msra.mxu0 0.0
    %226 = vmatprep.subr.mxu0 0.0
    %227 = vmatpush1.msra.mxu0 0.0
    %228 = vmatprep.subr.mxu0 0.0
    %229 = vmatpush1.msra.mxu0 0.0
    %230 = vmatprep.subr.mxu0 0.0
    %231 = vmatpush1.msra.mxu0 0.0
    %232 = vmatprep.subr.mxu0 0.0
    %233 = vmatpush1.msra.mxu0 0.0
    %234 = vmatprep.subr.mxu0 0.0
    %235 = vmatpush1.msra.mxu0 0.0
    %236 = vmatprep.subr.mxu0 0.0
    %237 = vmatpush1.msra.mxu0 0.0
    %238 = vmatprep.subr.mxu0 0.0
    %239 = vmatpush1.msra.mxu0 0.0
    %240 = vmatprep.subr.mxu0 0.0
    %241 = vmatpush1.msra.mxu0 0.0
    %242 = vmatprep.subr.mxu0 0.0
    %243 = vmatpush1.msra.mxu0 0.0
    %244 = vmatprep.subr.mxu0 0.0
    %245 = vmatpush1.msra.mxu0 0.0
    %246 = vmatprep.subr.mxu0 0.0
    %247 = vmatpush1.msra.mxu0 0.0
    %248 = vmatprep.subr.mxu0 0.0
    %249 = vmatpush1.msra.mxu0 0.0
    %250 = vmatprep.subr.mxu0 0.0
    %251 = vmatpush1.msra.mxu0 0.0
    %252 = vmatprep.subr.mxu0 0.0
    %253 = vmatpush1.msra.mxu0 0.0
    %254 = vmatprep.subr.mxu0 0.0
    %255 = vmatpush1.msra.mxu0 0.0
    %256 = vmatprep.subr.mxu0 0.0
    %257 = vmatpush1.msra.mxu0 0.0
    %258 = vmatprep.subr.mxu0 0.0
    %259 = vmatpush1.msra.mxu0 0.0
    %260 = vmatprep.mubr.f32.mxu0 0.0
    %v261 = vand.u32 %v47, 4294901760
    %v262 = vsub.f32 %v47, %v261
    %263 = vmatmul.mubr.f32.gmra.mrb[0].mxu0 %v262
    %v264 = vpop.f32.mrb[0].mxu0
    %v265 = vadd.f32 %v193, %v264
    %v266 = vpop.f32.mrb[0].mxu0
    %267 = vdwg.mxu0
    %268 = vmatprep.subr.mxu0 0.0
    %269 = vmatpush1.msra.mxu0 1.0
    %270 = vmatprep.subr.mxu0 0.0
    %271 = vmatpush1.msra.mxu0 1.0
    %272 = vmatprep.subr.mxu0 0.0
    %273 = vmatpush1.msra.mxu0 1.0
    %274 = vmatprep.subr.mxu0 0.0
    %275 = vmatpush1.msra.mxu0 1.0
    %276 = vmatprep.subr.mxu0 0.0
    %277 = vmatpush1.msra.mxu0 1.0
    %278 = vmatprep.subr.mxu0 0.0
    %279 = vmatpush1.msra.mxu0 1.0
    %280 = vmatprep.subr.mxu0 0.0
    %281 = vmatpush1.msra.mxu0 1.0
    %282 = vmatprep.subr.mxu0 0.0
    %283 = vmatpush1.msra.mxu0 1.0
    %284 = vmatprep.subr.mxu0 0.0
    %285 = vmatpush1.msra.mxu0 1.0
    %286 = vmatprep.subr.mxu0 0.0
    %287 = vmatpush1.msra.mxu0 1.0
    %288 = vmatprep.subr.mxu0 0.0
    %289 = vmatpush1.msra.mxu0 1.0
    %290 = vmatprep.subr.mxu0 0.0
    %291 = vmatpush1.msra.mxu0 1.0
    %292 = vmatprep.subr.mxu0 0.0
    %293 = vmatpush1.msra.mxu0 1.0
    %294 = vmatprep.subr.mxu0 0.0
    %295 = vmatpush1.msra.mxu0 1.0
    %296 = vmatprep.subr.mxu0 0.0
    %297 = vmatpush1.msra.mxu0 1.0
    %298 = vmatprep.subr.mxu0 0.0
    %299 = vmatpush1.msra.mxu0 1.0
    %300 = vmatprep.subr.mxu0 0.0
    %301 = vmatpush1.msra.mxu0 0.0
    %302 = vmatprep.subr.mxu0 0.0
    %303 = vmatpush1.msra.mxu0 0.0
    %304 = vmatprep.subr.mxu0 0.0
    %305 = vmatpush1.msra.mxu0 0.0
    %306 = vmatprep.subr.mxu0 0.0
    %307 = vmatpush1.msra.mxu0 0.0
    %308 = vmatprep.subr.mxu0 0.0
    %309 = vmatpush1.msra.mxu0 0.0
    %310 = vmatprep.subr.mxu0 0.0
    %311 = vmatpush1.msra.mxu0 0.0
    %312 = vmatprep.subr.mxu0 0.0
    %313 = vmatpush1.msra.mxu0 0.0
    %314 = vmatprep.subr.mxu0 0.0
    %315 = vmatpush1.msra.mxu0 0.0
    %316 = vmatprep.subr.mxu0 0.0
    %317 = vmatpush1.msra.mxu0 0.0
    %318 = vmatprep.subr.mxu0 0.0
    %319 = vmatpush1.msra.mxu0 0.0
    %320 = vmatprep.subr.mxu0 0.0
    %321 = vmatpush1.msra.mxu0 0.0
    %322 = vmatprep.subr.mxu0 0.0
    %323 = vmatpush1.msra.mxu0 0.0
    %324 = vmatprep.subr.mxu0 0.0
    %325 = vmatpush1.msra.mxu0 0.0
    %326 = vmatprep.subr.mxu0 0.0
    %327 = vmatpush1.msra.mxu0 0.0
    %328 = vmatprep.subr.mxu0 0.0
    %329 = vmatpush1.msra.mxu0 0.0
    %330 = vmatprep.subr.mxu0 0.0
    %331 = vmatpush1.msra.mxu0 0.0
    %332 = vmatprep.mubr.f32.mxu0 0.0
    %v333 = vand.u32 %v47, 4294901760
    %v334 = vsub.f32 %v47, %v333
    %v335 = vand.u32 %v334, 4294901760
    %336 = vmatmul.mubr.f32.gmra.mrb[0].mxu0 %v335
    %v337 = vpop.f32.mrb[0].mxu0
    %v338 = vadd.f32 %v265, %v337
    %v339 = vpop.f32.mrb[0].mxu0
    %340 = vdwg.mxu0
    %341 = vmatprep.subr.mxu0 0.0
    %342 = vmatpush1.msra.mxu0 0.0
    %343 = vmatprep.subr.mxu0 0.0
    %344 = vmatpush1.msra.mxu0 0.0
    %345 = vmatprep.subr.mxu0 0.0
    %346 = vmatpush1.msra.mxu0 0.0
    %347 = vmatprep.subr.mxu0 0.0
    %348 = vmatpush1.msra.mxu0 0.0
    %349 = vmatprep.subr.mxu0 0.0
    %350 = vmatpush1.msra.mxu0 0.0
    %351 = vmatprep.subr.mxu0 0.0
    %352 = vmatpush1.msra.mxu0 0.0
    %353 = vmatprep.subr.mxu0 0.0
    %354 = vmatpush1.msra.mxu0 0.0
    %355 = vmatprep.subr.mxu0 0.0
    %356 = vmatpush1.msra.mxu0 0.0
    %357 = vmatprep.subr.mxu0 0.0
    %358 = vmatpush1.msra.mxu0 0.0
    %359 = vmatprep.subr.mxu0 0.0
    %360 = vmatpush1.msra.mxu0 0.0
    %361 = vmatprep.subr.mxu0 0.0
    %362 = vmatpush1.msra.mxu0 0.0
    %363 = vmatprep.subr.mxu0 0.0
    %364 = vmatpush1.msra.mxu0 0.0
    %365 = vmatprep.subr.mxu0 0.0
    %366 = vmatpush1.msra.mxu0 0.0
    %367 = vmatprep.subr.mxu0 0.0
    %368 = vmatpush1.msra.mxu0 0.0
    %369 = vmatprep.subr.mxu0 0.0
    %370 = vmatpush1.msra.mxu0 0.0
    %371 = vmatprep.subr.mxu0 0.0
    %372 = vmatpush1.msra.mxu0 0.0
    %373 = vmatprep.subr.mxu0 0.0
    %374 = vmatpush1.msra.mxu0 0.0
    %375 = vmatprep.subr.mxu0 0.0
    %376 = vmatpush1.msra.mxu0 0.0
    %377 = vmatprep.subr.mxu0 0.0
    %378 = vmatpush1.msra.mxu0 0.0
    %379 = vmatprep.subr.mxu0 0.0
    %380 = vmatpush1.msra.mxu0 0.0
    %381 = vmatprep.subr.mxu0 0.0
    %382 = vmatpush1.msra.mxu0 0.0
    %383 = vmatprep.subr.mxu0 0.0
    %384 = vmatpush1.msra.mxu0 0.0
    %385 = vmatprep.subr.mxu0 0.0
    %386 = vmatpush1.msra.mxu0 0.0
    %387 = vmatprep.subr.mxu0 0.0
    %388 = vmatpush1.msra.mxu0 0.0
    %389 = vmatprep.subr.mxu0 0.0
    %390 = vmatpush1.msra.mxu0 0.0
    %391 = vmatprep.subr.mxu0 0.0
    %392 = vmatpush1.msra.mxu0 0.0
    %393 = vmatprep.subr.mxu0 0.0
    %394 = vmatpush1.msra.mxu0 0.0
    %395 = vmatprep.subr.mxu0 0.0
    %396 = vmatpush1.msra.mxu0 0.0
    %397 = vmatprep.subr.mxu0 0.0
    %398 = vmatpush1.msra.mxu0 0.0
    %399 = vmatprep.subr.mxu0 0.0
    %400 = vmatpush1.msra.mxu0 0.0
    %401 = vmatprep.subr.mxu0 0.0
    %402 = vmatpush1.msra.mxu0 0.0
    %403 = vmatprep.subr.mxu0 0.0
    %404 = vmatpush1.msra.mxu0 0.0
    %405 = vmatprep.mubr.f32.mxu0 0.0
    %v406 = vand.u32 %v47, 4294901760
    %407 = vmatmul.mubr.f32.gmra.mrb[0].mxu0 %v406
    %v408 = vpop.f32.mrb[0].mxu0
    %v409 = vadd.f32 %v338, %v408
    %v410 = vpop.f32.mrb[0].mxu0
    %411 = vdwg.mxu0
    %412 = vmatprep.subr.mxu0 0.0
    %413 = vmatpush1.msra.mxu0 1.0
    %414 = vmatprep.subr.mxu0 0.0
    %415 = vmatpush1.msra.mxu0 1.0
    %416 = vmatprep.subr.mxu0 0.0
    %417 = vmatpush1.msra.mxu0 1.0
    %418 = vmatprep.subr.mxu0 0.0
    %419 = vmatpush1.msra.mxu0 1.0
    %420 = vmatprep.subr.mxu0 0.0
    %421 = vmatpush1.msra.mxu0 1.0
    %422 = vmatprep.subr.mxu0 0.0
    %423 = vmatpush1.msra.mxu0 1.0
    %424 = vmatprep.subr.mxu0 0.0
    %425 = vmatpush1.msra.mxu0 1.0
    %426 = vmatprep.subr.mxu0 0.0
    %427 = vmatpush1.msra.mxu0 1.0
    %428 = vmatprep.subr.mxu0 0.0
    %429 = vmatpush1.msra.mxu0 1.0
    %430 = vmatprep.subr.mxu0 0.0
    %431 = vmatpush1.msra.mxu0 1.0
    %432 = vmatprep.subr.mxu0 0.0
    %433 = vmatpush1.msra.mxu0 1.0
    %434 = vmatprep.subr.mxu0 0.0
    %435 = vmatpush1.msra.mxu0 1.0
    %436 = vmatprep.subr.mxu0 0.0
    %437 = vmatpush1.msra.mxu0 1.0
    %438 = vmatprep.subr.mxu0 0.0
    %439 = vmatpush1.msra.mxu0 1.0
    %440 = vmatprep.subr.mxu0 0.0
    %441 = vmatpush1.msra.mxu0 1.0
    %442 = vmatprep.subr.mxu0 0.0
    %443 = vmatpush1.msra.mxu0 1.0
    %444 = vmatprep.subr.mxu0 0.0
    %445 = vmatpush1.msra.mxu0 0.0
    %446 = vmatprep.subr.mxu0 0.0
    %447 = vmatpush1.msra.mxu0 0.0
    %448 = vmatprep.subr.mxu0 0.0
    %449 = vmatpush1.msra.mxu0 0.0
    %450 = vmatprep.subr.mxu0 0.0
    %451 = vmatpush1.msra.mxu0 0.0
    %452 = vmatprep.subr.mxu0 0.0
    %453 = vmatpush1.msra.mxu0 0.0
    %454 = vmatprep.subr.mxu0 0.0
    %455 = vmatpush1.msra.mxu0 0.0
    %456 = vmatprep.subr.mxu0 0.0
    %457 = vmatpush1.msra.mxu0 0.0
    %458 = vmatprep.subr.mxu0 0.0
    %459 = vmatpush1.msra.mxu0 0.0
    %460 = vmatprep.subr.mxu0 0.0
    %461 = vmatpush1.msra.mxu0 0.0
    %462 = vmatprep.subr.mxu0 0.0
    %463 = vmatpush1.msra.mxu0 0.0
    %464 = vmatprep.subr.mxu0 0.0
    %465 = vmatpush1.msra.mxu0 0.0
    %466 = vmatprep.subr.mxu0 0.0
    %467 = vmatpush1.msra.mxu0 0.0
    %468 = vmatprep.subr.mxu0 0.0
    %469 = vmatpush1.msra.mxu0 0.0
    %470 = vmatprep.subr.mxu0 0.0
    %471 = vmatpush1.msra.mxu0 0.0
    %472 = vmatprep.subr.mxu0 0.0
    %473 = vmatpush1.msra.mxu0 0.0
    %474 = vmatprep.subr.mxu0 0.0
    %475 = vmatpush1.msra.mxu0 0.0
    %476 = vmatprep.mubr.f32.mxu0 0.0
    %v477 = vand.u32 %v47, 4294901760
    %478 = vmatmul.mubr.f32.gmra.mrb[0].mxu0 %v477
    %v479 = vpop.f32.mrb[0].mxu0
    %v480 = vadd.f32 %v409, %v479
    %v481 = vpop.f32.mrb[0].mxu0
    %482 = vdwg.mxu0
    %483 = vmatprep.subr.mxu0 0.0
    %484 = vmatpush1.msra.mxu0 1.0
    %485 = vmatprep.subr.mxu0 0.0
    %486 = vmatpush1.msra.mxu0 1.0
    %487 = vmatprep.subr.mxu0 0.0
    %488 = vmatpush1.msra.mxu0 1.0
    %489 = vmatprep.subr.mxu0 0.0
    %490 = vmatpush1.msra.mxu0 1.0
    %491 = vmatprep.subr.mxu0 0.0
    %492 = vmatpush1.msra.mxu0 1.0
    %493 = vmatprep.subr.mxu0 0.0
    %494 = vmatpush1.msra.mxu0 1.0
    %495 = vmatprep.subr.mxu0 0.0
    %496 = vmatpush1.msra.mxu0 1.0
    %497 = vmatprep.subr.mxu0 0.0
    %498 = vmatpush1.msra.mxu0 1.0
    %499 = vmatprep.subr.mxu0 0.0
    %500 = vmatpush1.msra.mxu0 1.0
    %501 = vmatprep.subr.mxu0 0.0
    %502 = vmatpush1.msra.mxu0 1.0
    %503 = vmatprep.subr.mxu0 0.0
    %504 = vmatpush1.msra.mxu0 1.0
    %505 = vmatprep.subr.mxu0 0.0
    %506 = vmatpush1.msra.mxu0 1.0
    %507 = vmatprep.subr.mxu0 0.0
    %508 = vmatpush1.msra.mxu0 1.0
    %509 = vmatprep.subr.mxu0 0.0
    %510 = vmatpush1.msra.mxu0 1.0
    %511 = vmatprep.subr.mxu0 0.0
    %512 = vmatpush1.msra.mxu0 1.0
    %513 = vmatprep.subr.mxu0 0.0
    %514 = vmatpush1.msra.mxu0 1.0
    %515 = vmatprep.subr.mxu0 0.0
    %516 = vmatpush1.msra.mxu0 0.0
    %517 = vmatprep.subr.mxu0 0.0
    %518 = vmatpush1.msra.mxu0 0.0
    %519 = vmatprep.subr.mxu0 0.0
    %520 = vmatpush1.msra.mxu0 0.0
    %521 = vmatprep.subr.mxu0 0.0
    %522 = vmatpush1.msra.mxu0 0.0
    %523 = vmatprep.subr.mxu0 0.0
    %524 = vmatpush1.msra.mxu0 0.0
    %525 = vmatprep.subr.mxu0 0.0
    %526 = vmatpush1.msra.mxu0 0.0
    %527 = vmatprep.subr.mxu0 0.0
    %528 = vmatpush1.msra.mxu0 0.0
    %529 = vmatprep.subr.mxu0 0.0
    %530 = vmatpush1.msra.mxu0 0.0
    %531 = vmatprep.subr.mxu0 0.0
    %532 = vmatpush1.msra.mxu0 0.0
    %533 = vmatprep.subr.mxu0 0.0
    %534 = vmatpush1.msra.mxu0 0.0
    %535 = vmatprep.subr.mxu0 0.0
    %536 = vmatpush1.msra.mxu0 0.0
    %537 = vmatprep.subr.mxu0 0.0
    %538 = vmatpush1.msra.mxu0 0.0
    %539 = vmatprep.subr.mxu0 0.0
    %540 = vmatpush1.msra.mxu0 0.0
    %541 = vmatprep.subr.mxu0 0.0
    %542 = vmatpush1.msra.mxu0 0.0
    %543 = vmatprep.subr.mxu0 0.0
    %544 = vmatpush1.msra.mxu0 0.0
    %545 = vmatprep.subr.mxu0 0.0
    %546 = vmatpush1.msra.mxu0 0.0
    %547 = vmatprep.mubr.f32.mxu0 0.0
    %v548 = vand.u32 %v49, 4294901760
    %v549 = vsub.f32 %v49, %v548
    %v550 = vand.u32 %v549, 4294901760
    %v551 = vsub.f32 %v549, %v550
    %v552 = vand.u32 %v551, 4294901760
    %553 = vmatmul.mubr.f32.gmra.mrb[0].mxu0 %v552
    %v554 = vpop.f32.mrb[0].mxu0
    %v555 = vadd.f32 0.0, %v554
    %v556 = vpop.f32.mrb[0].mxu0
    %557 = vdwg.mxu0
    %558 = vmatprep.subr.mxu0 0.0
    %559 = vmatpush1.msra.mxu0 0.0
    %560 = vmatprep.subr.mxu0 0.0
    %561 = vmatpush1.msra.mxu0 0.0
    %562 = vmatprep.subr.mxu0 0.0
    %563 = vmatpush1.msra.mxu0 0.0
    %564 = vmatprep.subr.mxu0 0.0
    %565 = vmatpush1.msra.mxu0 0.0
    %566 = vmatprep.subr.mxu0 0.0
    %567 = vmatpush1.msra.mxu0 0.0
    %568 = vmatprep.subr.mxu0 0.0
    %569 = vmatpush1.msra.mxu0 0.0
    %570 = vmatprep.subr.mxu0 0.0
    %571 = vmatpush1.msra.mxu0 0.0
    %572 = vmatprep.subr.mxu0 0.0
    %573 = vmatpush1.msra.mxu0 0.0
    %574 = vmatprep.subr.mxu0 0.0
    %575 = vmatpush1.msra.mxu0 0.0
    %576 = vmatprep.subr.mxu0 0.0
    %577 = vmatpush1.msra.mxu0 0.0
    %578 = vmatprep.subr.mxu0 0.0
    %579 = vmatpush1.msra.mxu0 0.0
    %580 = vmatprep.subr.mxu0 0.0
    %581 = vmatpush1.msra.mxu0 0.0
    %582 = vmatprep.subr.mxu0 0.0
    %583 = vmatpush1.msra.mxu0 0.0
    %584 = vmatprep.subr.mxu0 0.0
    %585 = vmatpush1.msra.mxu0 0.0
    %586 = vmatprep.subr.mxu0 0.0
    %587 = vmatpush1.msra.mxu0 0.0
    %588 = vmatprep.subr.mxu0 0.0
    %589 = vmatpush1.msra.mxu0 0.0
    %590 = vmatprep.subr.mxu0 0.0
    %591 = vmatpush1.msra.mxu0 0.0
    %592 = vmatprep.subr.mxu0 0.0
    %593 = vmatpush1.msra.mxu0 0.0
    %594 = vmatprep.subr.mxu0 0.0
    %595 = vmatpush1.msra.mxu0 0.0
    %596 = vmatprep.subr.mxu0 0.0
    %597 = vmatpush1.msra.mxu0 0.0
    %598 = vmatprep.subr.mxu0 0.0
    %599 = vmatpush1.msra.mxu0 0.0
    %600 = vmatprep.subr.mxu0 0.0
    %601 = vmatpush1.msra.mxu0 0.0
    %602 = vmatprep.subr.mxu0 0.0
    %603 = vmatpush1.msra.mxu0 0.0
    %604 = vmatprep.subr.mxu0 0.0
    %605 = vmatpush1.msra.mxu0 0.0
    %606 = vmatprep.subr.mxu0 0.0
    %607 = vmatpush1.msra.mxu0 0.0
    %608 = vmatprep.subr.mxu0 0.0
    %609 = vmatpush1.msra.mxu0 0.0
    %610 = vmatprep.subr.mxu0 0.0
    %611 = vmatpush1.msra.mxu0 0.0
    %612 = vmatprep.subr.mxu0 0.0
    %613 = vmatpush1.msra.mxu0 0.0
    %614 = vmatprep.subr.mxu0 0.0
    %615 = vmatpush1.msra.mxu0 0.0
    %616 = vmatprep.subr.mxu0 0.0
    %617 = vmatpush1.msra.mxu0 0.0
    %618 = vmatprep.subr.mxu0 0.0
    %619 = vmatpush1.msra.mxu0 0.0
    %620 = vmatprep.subr.mxu0 0.0
    %621 = vmatpush1.msra.mxu0 0.0
    %622 = vmatprep.mubr.f32.mxu0 0.0
    %v623 = vand.u32 %v49, 4294901760
    %624 = vmatmul.mubr.f32.gmra.mrb[0].mxu0 %v623
    %v625 = vpop.f32.mrb[0].mxu0
    %v626 = vadd.f32 %v555, %v625
    %v627 = vpop.f32.mrb[0].mxu0
    %628 = vdwg.mxu0
    %629 = vmatprep.subr.mxu0 0.0
    %630 = vmatpush1.msra.mxu0 0.0
    %631 = vmatprep.subr.mxu0 0.0
    %632 = vmatpush1.msra.mxu0 0.0
    %633 = vmatprep.subr.mxu0 0.0
    %634 = vmatpush1.msra.mxu0 0.0
    %635 = vmatprep.subr.mxu0 0.0
    %636 = vmatpush1.msra.mxu0 0.0
    %637 = vmatprep.subr.mxu0 0.0
    %638 = vmatpush1.msra.mxu0 0.0
    %639 = vmatprep.subr.mxu0 0.0
    %640 = vmatpush1.msra.mxu0 0.0
    %641 = vmatprep.subr.mxu0 0.0
    %642 = vmatpush1.msra.mxu0 0.0
    %643 = vmatprep.subr.mxu0 0.0
    %644 = vmatpush1.msra.mxu0 0.0
    %645 = vmatprep.subr.mxu0 0.0
    %646 = vmatpush1.msra.mxu0 0.0
    %647 = vmatprep.subr.mxu0 0.0
    %648 = vmatpush1.msra.mxu0 0.0
    %649 = vmatprep.subr.mxu0 0.0
    %650 = vmatpush1.msra.mxu0 0.0
    %651 = vmatprep.subr.mxu0 0.0
    %652 = vmatpush1.msra.mxu0 0.0
    %653 = vmatprep.subr.mxu0 0.0
    %654 = vmatpush1.msra.mxu0 0.0
    %655 = vmatprep.subr.mxu0 0.0
    %656 = vmatpush1.msra.mxu0 0.0
    %657 = vmatprep.subr.mxu0 0.0
    %658 = vmatpush1.msra.mxu0 0.0
    %659 = vmatprep.subr.mxu0 0.0
    %660 = vmatpush1.msra.mxu0 0.0
    %661 = vmatprep.subr.mxu0 0.0
    %662 = vmatpush1.msra.mxu0 0.0
    %663 = vmatprep.subr.mxu0 0.0
    %664 = vmatpush1.msra.mxu0 0.0
    %665 = vmatprep.subr.mxu0 0.0
    %666 = vmatpush1.msra.mxu0 0.0
    %667 = vmatprep.subr.mxu0 0.0
    %668 = vmatpush1.msra.mxu0 0.0
    %669 = vmatprep.subr.mxu0 0.0
    %670 = vmatpush1.msra.mxu0 0.0
    %671 = vmatprep.subr.mxu0 0.0
    %672 = vmatpush1.msra.mxu0 0.0
    %673 = vmatprep.subr.mxu0 0.0
    %674 = vmatpush1.msra.mxu0 0.0
    %675 = vmatprep.subr.mxu0 0.0
    %676 = vmatpush1.msra.mxu0 0.0
    %677 = vmatprep.subr.mxu0 0.0
    %678 = vmatpush1.msra.mxu0 0.0
    %679 = vmatprep.subr.mxu0 0.0
    %680 = vmatpush1.msra.mxu0 0.0
    %681 = vmatprep.subr.mxu0 0.0
    %682 = vmatpush1.msra.mxu0 0.0
    %683 = vmatprep.subr.mxu0 0.0
    %684 = vmatpush1.msra.mxu0 0.0
    %685 = vmatprep.subr.mxu0 0.0
    %686 = vmatpush1.msra.mxu0 0.0
    %687 = vmatprep.subr.mxu0 0.0
    %688 = vmatpush1.msra.mxu0 0.0
    %689 = vmatprep.subr.mxu0 0.0
    %690 = vmatpush1.msra.mxu0 0.0
    %691 = vmatprep.subr.mxu0 0.0
    %692 = vmatpush1.msra.mxu0 0.0
    %693 = vmatprep.mubr.f32.mxu0 0.0
    %v694 = vand.u32 %v49, 4294901760
    %v695 = vsub.f32 %v49, %v694
    %696 = vmatmul.mubr.f32.gmra.mrb[0].mxu0 %v695
    %v697 = vpop.f32.mrb[0].mxu0
    %v698 = vadd.f32 %v626, %v697
    %v699 = vpop.f32.mrb[0].mxu0
    %700 = vdwg.mxu0
    %701 = vmatprep.subr.mxu0 0.0
    %702 = vmatpush1.msra.mxu0 1.0
    %703 = vmatprep.subr.mxu0 0.0
    %704 = vmatpush1.msra.mxu0 1.0
    %705 = vmatprep.subr.mxu0 0.0
    %706 = vmatpush1.msra.mxu0 1.0
    %707 = vmatprep.subr.mxu0 0.0
    %708 = vmatpush1.msra.mxu0 1.0
    %709 = vmatprep.subr.mxu0 0.0
    %710 = vmatpush1.msra.mxu0 1.0
    %711 = vmatprep.subr.mxu0 0.0
    %712 = vmatpush1.msra.mxu0 1.0
    %713 = vmatprep.subr.mxu0 0.0
    %714 = vmatpush1.msra.mxu0 1.0
    %715 = vmatprep.subr.mxu0 0.0
    %716 = vmatpush1.msra.mxu0 1.0
    %717 = vmatprep.subr.mxu0 0.0
    %718 = vmatpush1.msra.mxu0 1.0
    %719 = vmatprep.subr.mxu0 0.0
    %720 = vmatpush1.msra.mxu0 1.0
    %721 = vmatprep.subr.mxu0 0.0
    %722 = vmatpush1.msra.mxu0 1.0
    %723 = vmatprep.subr.mxu0 0.0
    %724 = vmatpush1.msra.mxu0 1.0
    %725 = vmatprep.subr.mxu0 0.0
    %726 = vmatpush1.msra.mxu0 1.0
    %727 = vmatprep.subr.mxu0 0.0
    %728 = vmatpush1.msra.mxu0 1.0
    %729 = vmatprep.subr.mxu0 0.0
    %730 = vmatpush1.msra.mxu0 1.0
    %731 = vmatprep.subr.mxu0 0.0
    %732 = vmatpush1.msra.mxu0 1.0
    %733 = vmatprep.subr.mxu0 0.0
    %734 = vmatpush1.msra.mxu0 0.0
    %735 = vmatprep.subr.mxu0 0.0
    %736 = vmatpush1.msra.mxu0 0.0
    %737 = vmatprep.subr.mxu0 0.0
    %738 = vmatpush1.msra.mxu0 0.0
    %739 = vmatprep.subr.mxu0 0.0
    %740 = vmatpush1.msra.mxu0 0.0
    %741 = vmatprep.subr.mxu0 0.0
    %742 = vmatpush1.msra.mxu0 0.0
    %743 = vmatprep.subr.mxu0 0.0
    %744 = vmatpush1.msra.mxu0 0.0
    %745 = vmatprep.subr.mxu0 0.0
    %746 = vmatpush1.msra.mxu0 0.0
    %747 = vmatprep.subr.mxu0 0.0
    %748 = vmatpush1.msra.mxu0 0.0
    %749 = vmatprep.subr.mxu0 0.0
    %750 = vmatpush1.msra.mxu0 0.0
    %751 = vmatprep.subr.mxu0 0.0
    %752 = vmatpush1.msra.mxu0 0.0
    %753 = vmatprep.subr.mxu0 0.0
    %754 = vmatpush1.msra.mxu0 0.0
    %755 = vmatprep.subr.mxu0 0.0
    %756 = vmatpush1.msra.mxu0 0.0
    %757 = vmatprep.subr.mxu0 0.0
    %758 = vmatpush1.msra.mxu0 0.0
    %759 = vmatprep.subr.mxu0 0.0
    %760 = vmatpush1.msra.mxu0 0.0
    %761 = vmatprep.subr.mxu0 0.0
    %762 = vmatpush1.msra.mxu0 0.0
    %763 = vmatprep.subr.mxu0 0.0
    %764 = vmatpush1.msra.mxu0 0.0
    %765 = vmatprep.mubr.f32.mxu0 0.0
    %v766 = vand.u32 %v49, 4294901760
    %v767 = vsub.f32 %v49, %v766
    %v768 = vand.u32 %v767, 4294901760
    %769 = vmatmul.mubr.f32.gmra.mrb[0].mxu0 %v768
    %v770 = vpop.f32.mrb[0].mxu0
    %v771 = vadd.f32 %v698, %v770
    %v772 = vpop.f32.mrb[0].mxu0
    %773 = vdwg.mxu0
    %774 = vmatprep.subr.mxu0 0.0
    %775 = vmatpush1.msra.mxu0 0.0
    %776 = vmatprep.subr.mxu0 0.0
    %777 = vmatpush1.msra.mxu0 0.0
    %778 = vmatprep.subr.mxu0 0.0
    %779 = vmatpush1.msra.mxu0 0.0
    %780 = vmatprep.subr.mxu0 0.0
    %781 = vmatpush1.msra.mxu0 0.0
    %782 = vmatprep.subr.mxu0 0.0
    %783 = vmatpush1.msra.mxu0 0.0
    %784 = vmatprep.subr.mxu0 0.0
    %785 = vmatpush1.msra.mxu0 0.0
    %786 = vmatprep.subr.mxu0 0.0
    %787 = vmatpush1.msra.mxu0 0.0
    %788 = vmatprep.subr.mxu0 0.0
    %789 = vmatpush1.msra.mxu0 0.0
    %790 = vmatprep.subr.mxu0 0.0
    %791 = vmatpush1.msra.mxu0 0.0
    %792 = vmatprep.subr.mxu0 0.0
    %793 = vmatpush1.msra.mxu0 0.0
    %794 = vmatprep.subr.mxu0 0.0
    %795 = vmatpush1.msra.mxu0 0.0
    %796 = vmatprep.subr.mxu0 0.0
    %797 = vmatpush1.msra.mxu0 0.0
    %798 = vmatprep.subr.mxu0 0.0
    %799 = vmatpush1.msra.mxu0 0.0
    %800 = vmatprep.subr.mxu0 0.0
    %801 = vmatpush1.msra.mxu0 0.0
    %802 = vmatprep.subr.mxu0 0.0
    %803 = vmatpush1.msra.mxu0 0.0
    %804 = vmatprep.subr.mxu0 0.0
    %805 = vmatpush1.msra.mxu0 0.0
    %806 = vmatprep.subr.mxu0 0.0
    %807 = vmatpush1.msra.mxu0 0.0
    %808 = vmatprep.subr.mxu0 0.0
    %809 = vmatpush1.msra.mxu0 0.0
    %810 = vmatprep.subr.mxu0 0.0
    %811 = vmatpush1.msra.mxu0 0.0
    %812 = vmatprep.subr.mxu0 0.0
    %813 = vmatpush1.msra.mxu0 0.0
    %814 = vmatprep.subr.mxu0 0.0
    %815 = vmatpush1.msra.mxu0 0.0
    %816 = vmatprep.subr.mxu0 0.0
    %817 = vmatpush1.msra.mxu0 0.0
    %818 = vmatprep.subr.mxu0 0.0
    %819 = vmatpush1.msra.mxu0 0.0
    %820 = vmatprep.subr.mxu0 0.0
    %821 = vmatpush1.msra.mxu0 0.0
    %822 = vmatprep.subr.mxu0 0.0
    %823 = vmatpush1.msra.mxu0 0.0
    %824 = vmatprep.subr.mxu0 0.0
    %825 = vmatpush1.msra.mxu0 0.0
    %826 = vmatprep.subr.mxu0 0.0
    %827 = vmatpush1.msra.mxu0 0.0
    %828 = vmatprep.subr.mxu0 0.0
    %829 = vmatpush1.msra.mxu0 0.0
    %830 = vmatprep.subr.mxu0 0.0
    %831 = vmatpush1.msra.mxu0 0.0
    %832 = vmatprep.subr.mxu0 0.0
    %833 = vmatpush1.msra.mxu0 0.0
    %834 = vmatprep.subr.mxu0 0.0
    %835 = vmatpush1.msra.mxu0 0.0
    %836 = vmatprep.subr.mxu0 0.0
    %837 = vmatpush1.msra.mxu0 0.0
    %838 = vmatprep.mubr.f32.mxu0 0.0
    %v839 = vand.u32 %v49, 4294901760
    %840 = vmatmul.mubr.f32.gmra.mrb[0].mxu0 %v839
    %v841 = vpop.f32.mrb[0].mxu0
    %v842 = vadd.f32 %v771, %v841
    %v843 = vpop.f32.mrb[0].mxu0
    %844 = vdwg.mxu0
    %845 = vmatprep.subr.mxu0 0.0
    %846 = vmatpush1.msra.mxu0 1.0
    %847 = vmatprep.subr.mxu0 0.0
    %848 = vmatpush1.msra.mxu0 1.0
    %849 = vmatprep.subr.mxu0 0.0
    %850 = vmatpush1.msra.mxu0 1.0
    %851 = vmatprep.subr.mxu0 0.0
    %852 = vmatpush1.msra.mxu0 1.0
    %853 = vmatprep.subr.mxu0 0.0
    %854 = vmatpush1.msra.mxu0 1.0
    %855 = vmatprep.subr.mxu0 0.0
    %856 = vmatpush1.msra.mxu0 1.0
    %857 = vmatprep.subr.mxu0 0.0
    %858 = vmatpush1.msra.mxu0 1.0
    %859 = vmatprep.subr.mxu0 0.0
    %860 = vmatpush1.msra.mxu0 1.0
    %861 = vmatprep.subr.mxu0 0.0
    %862 = vmatpush1.msra.mxu0 1.0
    %863 = vmatprep.subr.mxu0 0.0
    %864 = vmatpush1.msra.mxu0 1.0
    %865 = vmatprep.subr.mxu0 0.0
    %866 = vmatpush1.msra.mxu0 1.0
    %867 = vmatprep.subr.mxu0 0.0
    %868 = vmatpush1.msra.mxu0 1.0
    %869 = vmatprep.subr.mxu0 0.0
    %870 = vmatpush1.msra.mxu0 1.0
    %871 = vmatprep.subr.mxu0 0.0
    %872 = vmatpush1.msra.mxu0 1.0
    %873 = vmatprep.subr.mxu0 0.0
    %874 = vmatpush1.msra.mxu0 1.0
    %875 = vmatprep.subr.mxu0 0.0
    %876 = vmatpush1.msra.mxu0 1.0
    %877 = vmatprep.subr.mxu0 0.0
    %878 = vmatpush1.msra.mxu0 0.0
    %879 = vmatprep.subr.mxu0 0.0
    %880 = vmatpush1.msra.mxu0 0.0
    %881 = vmatprep.subr.mxu0 0.0
    %882 = vmatpush1.msra.mxu0 0.0
    %883 = vmatprep.subr.mxu0 0.0
    %884 = vmatpush1.msra.mxu0 0.0
    %885 = vmatprep.subr.mxu0 0.0
    %886 = vmatpush1.msra.mxu0 0.0
    %887 = vmatprep.subr.mxu0 0.0
    %888 = vmatpush1.msra.mxu0 0.0
    %889 = vmatprep.subr.mxu0 0.0
    %890 = vmatpush1.msra.mxu0 0.0
    %891 = vmatprep.subr.mxu0 0.0
    %892 = vmatpush1.msra.mxu0 0.0
    %893 = vmatprep.subr.mxu0 0.0
    %894 = vmatpush1.msra.mxu0 0.0
    %895 = vmatprep.subr.mxu0 0.0
    %896 = vmatpush1.msra.mxu0 0.0
    %897 = vmatprep.subr.mxu0 0.0
    %898 = vmatpush1.msra.mxu0 0.0
    %899 = vmatprep.subr.mxu0 0.0
    %900 = vmatpush1.msra.mxu0 0.0
    %901 = vmatprep.subr.mxu0 0.0
    %902 = vmatpush1.msra.mxu0 0.0
    %903 = vmatprep.subr.mxu0 0.0
    %904 = vmatpush1.msra.mxu0 0.0
    %905 = vmatprep.subr.mxu0 0.0
    %906 = vmatpush1.msra.mxu0 0.0
    %907 = vmatprep.subr.mxu0 0.0
    %908 = vmatpush1.msra.mxu0 0.0
    %909 = vmatprep.mubr.f32.mxu0 0.0
    %v910 = vand.u32 %v49, 4294901760
    %911 = vmatmul.mubr.f32.gmra.mrb[0].mxu0 %v910
    %v912 = vpop.f32.mrb[0].mxu0
    %v913 = vadd.f32 %v842, %v912
    %v914 = vpop.f32.mrb[0].mxu0
    %915 = vdwg.mxu0
    %v916 = vlog2.pop %v480
    %v917 = vmul.f32 %v916, 0.6931472
    %v918 = vlog2.pop %v913
    %v919 = vmul.f32 %v918, 0.6931472
    %v920 = vsub.f32 %v917, %v919
    %v921 = vsub.f32 %v45, %v42
    %923 = vset.pattern.permute.xlu0 0
    %924 = vperm.xlu0 %923, %v920
    %v925 = vpop.permute.xlu0 %924
    %v927 = vadd.f32 %v921, %v925
    %v928 = vmul.f32 %v49, %v927
    %929 = vmatprep.subr.mxu0 0.0
    %930 = vmatpush1.msra.mxu0 1.0
    %931 = vmatprep.subr.mxu0 0.0
    %932 = vmatpush1.msra.mxu0 1.0
    %933 = vmatprep.subr.mxu0 0.0
    %934 = vmatpush1.msra.mxu0 1.0
    %935 = vmatprep.subr.mxu0 0.0
    %936 = vmatpush1.msra.mxu0 1.0
    %937 = vmatprep.subr.mxu0 0.0
    %938 = vmatpush1.msra.mxu0 1.0
    %939 = vmatprep.subr.mxu0 0.0
    %940 = vmatpush1.msra.mxu0 1.0
    %941 = vmatprep.subr.mxu0 0.0
    %942 = vmatpush1.msra.mxu0 1.0
    %943 = vmatprep.subr.mxu0 0.0
    %944 = vmatpush1.msra.mxu0 1.0
    %945 = vmatprep.subr.mxu0 0.0
    %946 = vmatpush1.msra.mxu0 1.0
    %947 = vmatprep.subr.mxu0 0.0
    %948 = vmatpush1.msra.mxu0 1.0
    %949 = vmatprep.subr.mxu0 0.0
    %950 = vmatpush1.msra.mxu0 1.0
    %951 = vmatprep.subr.mxu0 0.0
    %952 = vmatpush1.msra.mxu0 1.0
    %953 = vmatprep.subr.mxu0 0.0
    %954 = vmatpush1.msra.mxu0 1.0
    %955 = vmatprep.subr.mxu0 0.0
    %956 = vmatpush1.msra.mxu0 1.0
    %957 = vmatprep.subr.mxu0 0.0
    %958 = vmatpush1.msra.mxu0 1.0
    %959 = vmatprep.subr.mxu0 0.0
    %960 = vmatpush1.msra.mxu0 1.0
    %961 = vmatprep.subr.mxu0 0.0
    %962 = vmatpush1.msra.mxu0 0.0
    %963 = vmatprep.subr.mxu0 0.0
    %964 = vmatpush1.msra.mxu0 0.0
    %965 = vmatprep.subr.mxu0 0.0
    %966 = vmatpush1.msra.mxu0 0.0
    %967 = vmatprep.subr.mxu0 0.0
    %968 = vmatpush1.msra.mxu0 0.0
    %969 = vmatprep.subr.mxu0 0.0
    %970 = vmatpush1.msra.mxu0 0.0
    %971 = vmatprep.subr.mxu0 0.0
    %972 = vmatpush1.msra.mxu0 0.0
    %973 = vmatprep.subr.mxu0 0.0
    %974 = vmatpush1.msra.mxu0 0.0
    %975 = vmatprep.subr.mxu0 0.0
    %976 = vmatpush1.msra.mxu0 0.0
    %977 = vmatprep.subr.mxu0 0.0
    %978 = vmatpush1.msra.mxu0 0.0
    %979 = vmatprep.subr.mxu0 0.0
    %980 = vmatpush1.msra.mxu0 0.0
    %981 = vmatprep.subr.mxu0 0.0
    %982 = vmatpush1.msra.mxu0 0.0
    %983 = vmatprep.subr.mxu0 0.0
    %984 = vmatpush1.msra.mxu0 0.0
    %985 = vmatprep.subr.mxu0 0.0
    %986 = vmatpush1.msra.mxu0 0.0
    %987 = vmatprep.subr.mxu0 0.0
    %988 = vmatpush1.msra.mxu0 0.0
    %989 = vmatprep.subr.mxu0 0.0
    %990 = vmatpush1.msra.mxu0 0.0
    %991 = vmatprep.subr.mxu0 0.0
    %992 = vmatpush1.msra.mxu0 0.0
    %993 = vmatprep.mubr.f32.mxu0 0.0
    %v994 = vand.u32 %v928, 4294901760
    %v995 = vsub.f32 %v928, %v994
    %v996 = vand.u32 %v995, 4294901760
    %v997 = vsub.f32 %v995, %v996
    %v998 = vand.u32 %v997, 4294901760
    %999 = vmatmul.mubr.f32.gmra.mrb[0].mxu0 %v998
    %v1000 = vpop.f32.mrb[0].mxu0
    %v1001 = vadd.f32 0.0, %v1000
    %v1002 = vpop.f32.mrb[0].mxu0
    %1003 = vdwg.mxu0
    %1004 = vmatprep.subr.mxu0 0.0
    %1005 = vmatpush1.msra.mxu0 0.0
    %1006 = vmatprep.subr.mxu0 0.0
    %1007 = vmatpush1.msra.mxu0 0.0
    %1008 = vmatprep.subr.mxu0 0.0
    %1009 = vmatpush1.msra.mxu0 0.0
    %1010 = vmatprep.subr.mxu0 0.0
    %1011 = vmatpush1.msra.mxu0 0.0
    %1012 = vmatprep.subr.mxu0 0.0
    %1013 = vmatpush1.msra.mxu0 0.0
    %1014 = vmatprep.subr.mxu0 0.0
    %1015 = vmatpush1.msra.mxu0 0.0
    %1016 = vmatprep.subr.mxu0 0.0
    %1017 = vmatpush1.msra.mxu0 0.0
    %1018 = vmatprep.subr.mxu0 0.0
    %1019 = vmatpush1.msra.mxu0 0.0
    %1020 = vmatprep.subr.mxu0 0.0
    %1021 = vmatpush1.msra.mxu0 0.0
    %1022 = vmatprep.subr.mxu0 0.0
    %1023 = vmatpush1.msra.mxu0 0.0
    %1024 = vmatprep.subr.mxu0 0.0
    %1025 = vmatpush1.msra.mxu0 0.0
    %1026 = vmatprep.subr.mxu0 0.0
    %1027 = vmatpush1.msra.mxu0 0.0
    %1028 = vmatprep.subr.mxu0 0.0
    %1029 = vmatpush1.msra.mxu0 0.0
    %1030 = vmatprep.subr.mxu0 0.0
    %1031 = vmatpush1.msra.mxu0 0.0
    %1032 = vmatprep.subr.mxu0 0.0
    %1033 = vmatpush1.msra.mxu0 0.0
    %1034 = vmatprep.subr.mxu0 0.0
    %1035 = vmatpush1.msra.mxu0 0.0
    %1036 = vmatprep.subr.mxu0 0.0
    %1037 = vmatpush1.msra.mxu0 0.0
    %1038 = vmatprep.subr.mxu0 0.0
    %1039 = vmatpush1.msra.mxu0 0.0
    %1040 = vmatprep.subr.mxu0 0.0
    %1041 = vmatpush1.msra.mxu0 0.0
    %1042 = vmatprep.subr.mxu0 0.0
    %1043 = vmatpush1.msra.mxu0 0.0
    %1044 = vmatprep.subr.mxu0 0.0
    %1045 = vmatpush1.msra.mxu0 0.0
    %1046 = vmatprep.subr.mxu0 0.0
    %1047 = vmatpush1.msra.mxu0 0.0
    %1048 = vmatprep.subr.mxu0 0.0
    %1049 = vmatpush1.msra.mxu0 0.0
    %1050 = vmatprep.subr.mxu0 0.0
    %1051 = vmatpush1.msra.mxu0 0.0
    %1052 = vmatprep.subr.mxu0 0.0
    %1053 = vmatpush1.msra.mxu0 0.0
    %1054 = vmatprep.subr.mxu0 0.0
    %1055 = vmatpush1.msra.mxu0 0.0
    %1056 = vmatprep.subr.mxu0 0.0
    %1057 = vmatpush1.msra.mxu0 0.0
    %1058 = vmatprep.subr.mxu0 0.0
    %1059 = vmatpush1.msra.mxu0 0.0
    %1060 = vmatprep.subr.mxu0 0.0
    %1061 = vmatpush1.msra.mxu0 0.0
    %1062 = vmatprep.subr.mxu0 0.0
    %1063 = vmatpush1.msra.mxu0 0.0
    %1064 = vmatprep.subr.mxu0 0.0
    %1065 = vmatpush1.msra.mxu0 0.0
    %1066 = vmatprep.subr.mxu0 0.0
    %1067 = vmatpush1.msra.mxu0 0.0
    %1068 = vmatprep.mubr.f32.mxu0 0.0
    %v1069 = vand.u32 %v928, 4294901760
    %1070 = vmatmul.mubr.f32.gmra.mrb[0].mxu0 %v1069
    %v1071 = vpop.f32.mrb[0].mxu0
    %v1072 = vadd.f32 %v1001, %v1071
    %v1073 = vpop.f32.mrb[0].mxu0
    %1074 = vdwg.mxu0
    %1075 = vmatprep.subr.mxu0 0.0
    %1076 = vmatpush1.msra.mxu0 0.0
    %1077 = vmatprep.subr.mxu0 0.0
    %1078 = vmatpush1.msra.mxu0 0.0
    %1079 = vmatprep.subr.mxu0 0.0
    %1080 = vmatpush1.msra.mxu0 0.0
    %1081 = vmatprep.subr.mxu0 0.0
    %1082 = vmatpush1.msra.mxu0 0.0
    %1083 = vmatprep.subr.mxu0 0.0
    %1084 = vmatpush1.msra.mxu0 0.0
    %1085 = vmatprep.subr.mxu0 0.0
    %1086 = vmatpush1.msra.mxu0 0.0
    %1087 = vmatprep.subr.mxu0 0.0
    %1088 = vmatpush1.msra.mxu0 0.0
    %1089 = vmatprep.subr.mxu0 0.0
    %1090 = vmatpush1.msra.mxu0 0.0
    %1091 = vmatprep.subr.mxu0 0.0
    %1092 = vmatpush1.msra.mxu0 0.0
    %1093 = vmatprep.subr.mxu0 0.0
    %1094 = vmatpush1.msra.mxu0 0.0
    %1095 = vmatprep.subr.mxu0 0.0
    %1096 = vmatpush1.msra.mxu0 0.0
    %1097 = vmatprep.subr.mxu0 0.0
    %1098 = vmatpush1.msra.mxu0 0.0
    %1099 = vmatprep.subr.mxu0 0.0
    %1100 = vmatpush1.msra.mxu0 0.0
    %1101 = vmatprep.subr.mxu0 0.0
    %1102 = vmatpush1.msra.mxu0 0.0
    %1103 = vmatprep.subr.mxu0 0.0
    %1104 = vmatpush1.msra.mxu0 0.0
    %1105 = vmatprep.subr.mxu0 0.0
    %1106 = vmatpush1.msra.mxu0 0.0
    %1107 = vmatprep.subr.mxu0 0.0
    %1108 = vmatpush1.msra.mxu0 0.0
    %1109 = vmatprep.subr.mxu0 0.0
    %1110 = vmatpush1.msra.mxu0 0.0
    %1111 = vmatprep.subr.mxu0 0.0
    %1112 = vmatpush1.msra.mxu0 0.0
    %1113 = vmatprep.subr.mxu0 0.0
    %1114 = vmatpush1.msra.mxu0 0.0
    %1115 = vmatprep.subr.mxu0 0.0
    %1116 = vmatpush1.msra.mxu0 0.0
    %1117 = vmatprep.subr.mxu0 0.0
    %1118 = vmatpush1.msra.mxu0 0.0
    %1119 = vmatprep.subr.mxu0 0.0
    %1120 = vmatpush1.msra.mxu0 0.0
    %1121 = vmatprep.subr.mxu0 0.0
    %1122 = vmatpush1.msra.mxu0 0.0
    %1123 = vmatprep.subr.mxu0 0.0
    %1124 = vmatpush1.msra.mxu0 0.0
    %1125 = vmatprep.subr.mxu0 0.0
    %1126 = vmatpush1.msra.mxu0 0.0
    %1127 = vmatprep.subr.mxu0 0.0
    %1128 = vmatpush1.msra.mxu0 0.0
    %1129 = vmatprep.subr.mxu0 0.0
    %1130 = vmatpush1.msra.mxu0 0.0
    %1131 = vmatprep.subr.mxu0 0.0
    %1132 = vmatpush1.msra.mxu0 0.0
    %1133 = vmatprep.subr.mxu0 0.0
    %1134 = vmatpush1.msra.mxu0 0.0
    %1135 = vmatprep.subr.mxu0 0.0
    %1136 = vmatpush1.msra.mxu0 0.0
    %1137 = vmatprep.subr.mxu0 0.0
    %1138 = vmatpush1.msra.mxu0 0.0
    %1139 = vmatprep.mubr.f32.mxu0 0.0
    %v1140 = vand.u32 %v928, 4294901760
    %v1141 = vsub.f32 %v928, %v1140
    %1142 = vmatmul.mubr.f32.gmra.mrb[0].mxu0 %v1141
    %v1143 = vpop.f32.mrb[0].mxu0
    %v1144 = vadd.f32 %v1072, %v1143
    %v1145 = vpop.f32.mrb[0].mxu0
    %1146 = vdwg.mxu0
    %1147 = vmatprep.subr.mxu0 0.0
    %1148 = vmatpush1.msra.mxu0 1.0
    %1149 = vmatprep.subr.mxu0 0.0
    %1150 = vmatpush1.msra.mxu0 1.0
    %1151 = vmatprep.subr.mxu0 0.0
    %1152 = vmatpush1.msra.mxu0 1.0
    %1153 = vmatprep.subr.mxu0 0.0
    %1154 = vmatpush1.msra.mxu0 1.0
    %1155 = vmatprep.subr.mxu0 0.0
    %1156 = vmatpush1.msra.mxu0 1.0
    %1157 = vmatprep.subr.mxu0 0.0
    %1158 = vmatpush1.msra.mxu0 1.0
    %1159 = vmatprep.subr.mxu0 0.0
    %1160 = vmatpush1.msra.mxu0 1.0
    %1161 = vmatprep.subr.mxu0 0.0
    %1162 = vmatpush1.msra.mxu0 1.0
    %1163 = vmatprep.subr.mxu0 0.0
    %1164 = vmatpush1.msra.mxu0 1.0
    %1165 = vmatprep.subr.mxu0 0.0
    %1166 = vmatpush1.msra.mxu0 1.0
    %1167 = vmatprep.subr.mxu0 0.0
    %1168 = vmatpush1.msra.mxu0 1.0
    %1169 = vmatprep.subr.mxu0 0.0
    %1170 = vmatpush1.msra.mxu0 1.0
    %1171 = vmatprep.subr.mxu0 0.0
    %1172 = vmatpush1.msra.mxu0 1.0
    %1173 = vmatprep.subr.mxu0 0.0
    %1174 = vmatpush1.msra.mxu0 1.0
    %1175 = vmatprep.subr.mxu0 0.0
    %1176 = vmatpush1.msra.mxu0 1.0
    %1177 = vmatprep.subr.mxu0 0.0
    %1178 = vmatpush1.msra.mxu0 1.0
    %1179 = vmatprep.subr.mxu0 0.0
    %1180 = vmatpush1.msra.mxu0 0.0
    %1181 = vmatprep.subr.mxu0 0.0
    %1182 = vmatpush1.msra.mxu0 0.0
    %1183 = vmatprep.subr.mxu0 0.0
    %1184 = vmatpush1.msra.mxu0 0.0
    %1185 = vmatprep.subr.mxu0 0.0
    %1186 = vmatpush1.msra.mxu0 0.0
    %1187 = vmatprep.subr.mxu0 0.0
    %1188 = vmatpush1.msra.mxu0 0.0
    %1189 = vmatprep.subr.mxu0 0.0
    %1190 = vmatpush1.msra.mxu0 0.0
    %1191 = vmatprep.subr.mxu0 0.0
    %1192 = vmatpush1.msra.mxu0 0.0
    %1193 = vmatprep.subr.mxu0 0.0
    %1194 = vmatpush1.msra.mxu0 0.0
    %1195 = vmatprep.subr.mxu0 0.0
    %1196 = vmatpush1.msra.mxu0 0.0
    %1197 = vmatprep.subr.mxu0 0.0
    %1198 = vmatpush1.msra.mxu0 0.0
    %1199 = vmatprep.subr.mxu0 0.0
    %1200 = vmatpush1.msra.mxu0 0.0
    %1201 = vmatprep.subr.mxu0 0.0
    %1202 = vmatpush1.msra.mxu0 0.0
    %1203 = vmatprep.subr.mxu0 0.0
    %1204 = vmatpush1.msra.mxu0 0.0
    %1205 = vmatprep.subr.mxu0 0.0
    %1206 = vmatpush1.msra.mxu0 0.0
    %1207 = vmatprep.subr.mxu0 0.0
    %1208 = vmatpush1.msra.mxu0 0.0
    %1209 = vmatprep.subr.mxu0 0.0
    %1210 = vmatpush1.msra.mxu0 0.0
    %1211 = vmatprep.mubr.f32.mxu0 0.0
    %v1212 = vand.u32 %v928, 4294901760
    %v1213 = vsub.f32 %v928, %v1212
    %v1214 = vand.u32 %v1213, 4294901760
    %1215 = vmatmul.mubr.f32.gmra.mrb[0].mxu0 %v1214
    %v1216 = vpop.f32.mrb[0].mxu0
    %v1217 = vadd.f32 %v1144, %v1216
    %v1218 = vpop.f32.mrb[0].mxu0
    %1219 = vdwg.mxu0
    %1220 = vmatprep.subr.mxu0 0.0
    %1221 = vmatpush1.msra.mxu0 0.0
    %1222 = vmatprep.subr.mxu0 0.0
    %1223 = vmatpush1.msra.mxu0 0.0
    %1224 = vmatprep.subr.mxu0 0.0
    %1225 = vmatpush1.msra.mxu0 0.0
    %1226 = vmatprep.subr.mxu0 0.0
    %1227 = vmatpush1.msra.mxu0 0.0
    %1228 = vmatprep.subr.mxu0 0.0
    %1229 = vmatpush1.msra.mxu0 0.0
    %1230 = vmatprep.subr.mxu0 0.0
    %1231 = vmatpush1.msra.mxu0 0.0
    %1232 = vmatprep.subr.mxu0 0.0
    %1233 = vmatpush1.msra.mxu0 0.0
    %1234 = vmatprep.subr.mxu0 0.0
    %1235 = vmatpush1.msra.mxu0 0.0
    %1236 = vmatprep.subr.mxu0 0.0
    %1237 = vmatpush1.msra.mxu0 0.0
    %1238 = vmatprep.subr.mxu0 0.0
    %1239 = vmatpush1.msra.mxu0 0.0
    %1240 = vmatprep.subr.mxu0 0.0
    %1241 = vmatpush1.msra.mxu0 0.0
    %1242 = vmatprep.subr.mxu0 0.0
    %1243 = vmatpush1.msra.mxu0 0.0
    %1244 = vmatprep.subr.mxu0 0.0
    %1245 = vmatpush1.msra.mxu0 0.0
    %1246 = vmatprep.subr.mxu0 0.0
    %1247 = vmatpush1.msra.mxu0 0.0
    %1248 = vmatprep.subr.mxu0 0.0
    %1249 = vmatpush1.msra.mxu0 0.0
    %1250 = vmatprep.subr.mxu0 0.0
    %1251 = vmatpush1.msra.mxu0 0.0
    %1252 = vmatprep.subr.mxu0 0.0
    %1253 = vmatpush1.msra.mxu0 0.0
    %1254 = vmatprep.subr.mxu0 0.0
    %1255 = vmatpush1.msra.mxu0 0.0
    %1256 = vmatprep.subr.mxu0 0.0
    %1257 = vmatpush1.msra.mxu0 0.0
    %1258 = vmatprep.subr.mxu0 0.0
    %1259 = vmatpush1.msra.mxu0 0.0
    %1260 = vmatprep.subr.mxu0 0.0
    %1261 = vmatpush1.msra.mxu0 0.0
    %1262 = vmatprep.subr.mxu0 0.0
    %1263 = vmatpush1.msra.mxu0 0.0
    %1264 = vmatprep.subr.mxu0 0.0
    %1265 = vmatpush1.msra.mxu0 0.0
    %1266 = vmatprep.subr.mxu0 0.0
    %1267 = vmatpush1.msra.mxu0 0.0
    %1268 = vmatprep.subr.mxu0 0.0
    %1269 = vmatpush1.msra.mxu0 0.0
    %1270 = vmatprep.subr.mxu0 0.0
    %1271 = vmatpush1.msra.mxu0 0.0
    %1272 = vmatprep.subr.mxu0 0.0
    %1273 = vmatpush1.msra.mxu0 0.0
    %1274 = vmatprep.subr.mxu0 0.0
    %1275 = vmatpush1.msra.mxu0 0.0
    %1276 = vmatprep.subr.mxu0 0.0
    %1277 = vmatpush1.msra.mxu0 0.0
    %1278 = vmatprep.subr.mxu0 0.0
    %1279 = vmatpush1.msra.mxu0 0.0
    %1280 = vmatprep.subr.mxu0 0.0
    %1281 = vmatpush1.msra.mxu0 0.0
    %1282 = vmatprep.subr.mxu0 0.0
    %1283 = vmatpush1.msra.mxu0 0.0
    %1284 = vmatprep.mubr.f32.mxu0 0.0
    %v1285 = vand.u32 %v928, 4294901760
    %1286 = vmatmul.mubr.f32.gmra.mrb[0].mxu0 %v1285
    %v1287 = vpop.f32.mrb[0].mxu0
    %v1288 = vadd.f32 %v1217, %v1287
    %v1289 = vpop.f32.mrb[0].mxu0
    %1290 = vdwg.mxu0
    %1291 = vmatprep.subr.mxu0 0.0
    %1292 = vmatpush1.msra.mxu0 1.0
    %1293 = vmatprep.subr.mxu0 0.0
    %1294 = vmatpush1.msra.mxu0 1.0
    %1295 = vmatprep.subr.mxu0 0.0
    %1296 = vmatpush1.msra.mxu0 1.0
    %1297 = vmatprep.subr.mxu0 0.0
    %1298 = vmatpush1.msra.mxu0 1.0
    %1299 = vmatprep.subr.mxu0 0.0
    %1300 = vmatpush1.msra.mxu0 1.0
    %1301 = vmatprep.subr.mxu0 0.0
    %1302 = vmatpush1.msra.mxu0 1.0
    %1303 = vmatprep.subr.mxu0 0.0
    %1304 = vmatpush1.msra.mxu0 1.0
    %1305 = vmatprep.subr.mxu0 0.0
    %1306 = vmatpush1.msra.mxu0 1.0
    %1307 = vmatprep.subr.mxu0 0.0
    %1308 = vmatpush1.msra.mxu0 1.0
    %1309 = vmatprep.subr.mxu0 0.0
    %1310 = vmatpush1.msra.mxu0 1.0
    %1311 = vmatprep.subr.mxu0 0.0
    %1312 = vmatpush1.msra.mxu0 1.0
    %1313 = vmatprep.subr.mxu0 0.0
    %1314 = vmatpush1.msra.mxu0 1.0
    %1315 = vmatprep.subr.mxu0 0.0
    %1316 = vmatpush1.msra.mxu0 1.0
    %1317 = vmatprep.subr.mxu0 0.0
    %1318 = vmatpush1.msra.mxu0 1.0
    %1319 = vmatprep.subr.mxu0 0.0
    %1320 = vmatpush1.msra.mxu0 1.0
    %1321 = vmatprep.subr.mxu0 0.0
    %1322 = vmatpush1.msra.mxu0 1.0
    %1323 = vmatprep.subr.mxu0 0.0
    %1324 = vmatpush1.msra.mxu0 0.0
    %1325 = vmatprep.subr.mxu0 0.0
    %1326 = vmatpush1.msra.mxu0 0.0
    %1327 = vmatprep.subr.mxu0 0.0
    %1328 = vmatpush1.msra.mxu0 0.0
    %1329 = vmatprep.subr.mxu0 0.0
    %1330 = vmatpush1.msra.mxu0 0.0
    %1331 = vmatprep.subr.mxu0 0.0
    %1332 = vmatpush1.msra.mxu0 0.0
    %1333 = vmatprep.subr.mxu0 0.0
    %1334 = vmatpush1.msra.mxu0 0.0
    %1335 = vmatprep.subr.mxu0 0.0
    %1336 = vmatpush1.msra.mxu0 0.0
    %1337 = vmatprep.subr.mxu0 0.0
    %1338 = vmatpush1.msra.mxu0 0.0
    %1339 = vmatprep.subr.mxu0 0.0
    %1340 = vmatpush1.msra.mxu0 0.0
    %1341 = vmatprep.subr.mxu0 0.0
    %1342 = vmatpush1.msra.mxu0 0.0
    %1343 = vmatprep.subr.mxu0 0.0
    %1344 = vmatpush1.msra.mxu0 0.0
    %1345 = vmatprep.subr.mxu0 0.0
    %1346 = vmatpush1.msra.mxu0 0.0
    %1347 = vmatprep.subr.mxu0 0.0
    %1348 = vmatpush1.msra.mxu0 0.0
    %1349 = vmatprep.subr.mxu0 0.0
    %1350 = vmatpush1.msra.mxu0 0.0
    %1351 = vmatprep.subr.mxu0 0.0
    %1352 = vmatpush1.msra.mxu0 0.0
    %1353 = vmatprep.subr.mxu0 0.0
    %1354 = vmatpush1.msra.mxu0 0.0
    %1355 = vmatprep.mubr.f32.mxu0 0.0
    %v1356 = vand.u32 %v928, 4294901760
    %1357 = vmatmul.mubr.f32.gmra.mrb[0].mxu0 %v1356
    %v1358 = vpop.f32.mrb[0].mxu0
    %v1359 = vadd.f32 %v1288, %v1358
    %v1360 = vpop.f32.mrb[0].mxu0
    %1361 = vdwg.mxu0
    %v1362 = vrcp.pop %v913
    %v1363 = vmul.f32 %v1359, %v1362
    %vm1364 = vcmask 7168
    %v1365 = vsel %vm1364, %v1363, 0.0
    %1366 = vadd.xlane.f32.xlu0 %v1365
    %v1367 = vpop.xlane.xlu0 %1366
    %v1368 = vrot.slane %v1367, 4
    %v1369 = vadd.f32 %v1367, %v1368
    %v1370 = vrot.slane %v1369, 2
    %v1371 = vadd.f32 %v1369, %v1370
    %v1372 = vrot.slane %v1371, 1
    %v1373 = vadd.f32 %v1371, %v1372
    %s1374 = vtos %v1373
    %v1375 = vstv %s1374
    %1376 = vst [vmem:[#allocation7] sm:$0xff] %v1375
    // Predicated region
    $region18: #{tpu_custom_call.1} parent=1 // pred_check
      _
    $region19: #{tpu_custom_call.1} parent=1 // pred_check_branch
      %1378 = sbr.rel (0) target = $region21
    $region20: #{tpu_custom_call.1} parent=1 // pred_region
      %s1380 = ssub.s32 128, 128
      %1381 = vsyncadd [#allocation4], %s1380
      %s1383 = sshll.u32 [#allocation7], 4
      %s1384 = int_to_ptr.vmem [resolvable:$true] %s1383
      %1386 = dma.vmem_to_hbm [thread:$0]  %s1384, 128, %s2, [#allocation4]
    $region21: #{tpu_custom_call.1} parent=1 // pred_fallthru
      _
    // Predicated region
    $region22: #{tpu_custom_call.1} parent=1 // pred_check
      _
    $region23: #{tpu_custom_call.1} parent=1 // pred_check_branch
      %1388 = sbr.rel (0) target = $region25
    $region24: #{tpu_custom_call.1} parent=1 // pred_region
      %1389 = dma.done [#allocation4], 128
    $region25: #{tpu_custom_call.1} parent=1 // pred_fallthru
      _
    %1390 = vsyncpa [#allocation3], 1
    %1391 = vsyncpa [#allocation6], 1
    %1392 = vsyncpa [#allocation4], 1

</llo_original>
